<compile_context>
chip_gen: v6e
topology: v6e:2x2x1
jax: 0.10.0
libtpu: 0.0.40
codegen_flags: <defaults>
</compile_context>

<pallas_src>
import math

import jax
import jax.numpy as jnp
from jax import lax
from jax.experimental import pallas as pl
from jax.experimental.pallas import tpu as pltpu

_EPS = 1e-15
_LANE = 128
_TM_MAX = 1024  # rows per block: 1024 x 128 f32 = 512 KiB per input buffer

_INV_SQRT2 = 0.7071067811865476
_INV_SQRT_PI = 0.5641895835477563
_INV_SQRT_2PI = 0.3989422804014327

# Abramowitz & Stegun 7.1.26 coefficients (max abs err ~1.5e-7).
_A1 = 0.254829592
_A2 = -0.284496736
_A3 = 1.421413741
_A4 = -1.453152027
_A5 = 1.061405429
_P = 0.3275911


def _recip(x):
    # EUP reciprocal estimate + one Newton-Raphson step (~f32 accuracy).
    # Moves the bulk of the divide onto the near-idle EUP slot.
    r = pl.reciprocal(x, approx=True)
    return r * (2.0 - x * r)


def _ndtr_tail(abs_z, e):
    """0.5 * erfc(abs_z) given a precomputed e = exp(-abs_z**2)."""
    t = _recip(1.0 + _P * abs_z)
    poly = ((((_A5 * t + _A4) * t + _A3) * t + _A2) * t + _A1) * t
    return 0.5 * (poly * e)


def _make_crps_kernel(n_valid, tm, num_blocks, needs_mask):
    def kernel(mean_ref, std_ref, tgt_ref, out_ref):
        i = pl.program_id(0)

        @pl.when(i == 0)
        def _():
            out_ref[...] = jnp.zeros_like(out_ref)

        eps = jnp.float32(_EPS)
        m = mean_ref[...]
        s = std_ref[...]
        y = tgt_ref[...]

        # Exact divide here (precision-critical path; see header comment).
        inv_s = 1.0 / (s + eps)
        nd = (y - m + eps) * inv_s           # (target - mean + eps) / (std + eps)
        q = (m + eps) * inv_s                # (mean + eps) / (std + eps)

        # Only two EUP exponentials per element; everything else reuses them.
        e_q = jnp.exp(-0.5 * q * q)          # exp(-q^2 / 2)
        e_n = jnp.exp(-0.5 * nd * nd)        # exp(-nd^2 / 2) == sqrt(2pi)*pdf(nd)

        aq = jnp.abs(q)
        an = jnp.abs(nd)

        tail_q = _ndtr_tail(aq * _INV_SQRT2, e_q)        # Phi(-|q|)
        tail_n = _ndtr_tail(an * _INV_SQRT2, e_n)        # Phi(-|nd|)
        tail_s = _ndtr_tail(aq, e_q * e_q)               # Phi(-|sqrt2*q|)

        q_neg = q < 0.0
        cdf = jnp.where(q_neg, tail_q, 1.0 - tail_q)
        cdf_s = jnp.where(q_neg, tail_s, 1.0 - tail_s)
        cdf_n = jnp.where(nd < 0.0, tail_n, 1.0 - tail_n)

        pdf_n = e_n * _INV_SQRT_2PI
        inv_cdf = _recip(cdf)

        crps = s * (inv_cdf * inv_cdf) * (
            nd * cdf * (2.0 * cdf_n + cdf - 2.0)
            + 2.0 * pdf_n * cdf
            - _INV_SQRT_PI * cdf_s)

        def _accumulate(vals):
            # Fold (tm, 128) onto a single (8, 128) vreg before touching the
            # accumulator: removes tm/8 accumulator loads/stores per step.
            folded = vals[0:8, :]
            for r in range(8, tm, 8):
                folded = folded + vals[r:r + 8, :]
            out_ref[...] += folded

        if needs_mask:
            # Only the final block can contain padding / out-of-range rows,
            # so only it pays for the iota/compare/select mask.
            last = num_blocks - 1

            @pl.when(i != last)
            def _():
                _accumulate(crps)

            @pl.when(i == last)
            def _():
                row_ids = lax.broadcasted_iota(jnp.int32, (tm, _LANE), 0)
                col_ids = lax.broadcasted_iota(jnp.int32, (tm, _LANE), 1)
                gidx = (i * tm + row_ids) * _LANE + col_ids
                _accumulate(jnp.where(gidx < n_valid, crps, 0.0))
        else:
            _accumulate(crps)

    return kernel


def crps_gaussian_truncated_loss(pred_mean, pred_stddev, target):
    """Returns mean CRPS (scalar f32), matching the PyTorch module forward."""
    n = pred_mean.size
    rows = (n + _LANE - 1) // _LANE
    lane_pad = rows * _LANE - n

    def prep(x):
        x = jnp.ravel(x).astype(jnp.float32)
        if lane_pad:
            # Only when n % 128 != 0.  Zero padding is safe: crps = stddev*(...)
            # and padded stddev == 0 (and it is masked out anyway).
            x = jnp.pad(x, (0, lane_pad))
        return x.reshape(rows, _LANE)        # free for contiguous inputs

    m2 = prep(pred_mean)
    s2 = prep(pred_stddev)
    t2 = prep(target)

    tm = min(_TM_MAX, ((rows + 7) // 8) * 8)
    num_blocks = (rows + tm - 1) // tm
    needs_mask = num_blocks * tm * _LANE > n  # partial trailing block / padding

    in_spec = pl.BlockSpec((tm, _LANE), lambda i: (i, 0))

    partial = pl.pallas_call(
        _make_crps_kernel(n, tm, num_blocks, needs_mask),
        out_shape=jax.ShapeDtypeStruct((8, _LANE), jnp.float32),
        grid_spec=pltpu.PrefetchScalarGridSpec(
            num_scalar_prefetch=0,
            grid=(num_blocks,),
            in_specs=[in_spec, in_spec, in_spec],
            out_specs=pl.BlockSpec((8, _LANE), lambda i: (0, 0)),
        ),
        compiler_params=pltpu.CompilerParams(
            dimension_semantics=("arbitrary",),
            vmem_limit_bytes=32 * 1024 * 1024),
    )(m2, s2, t2)

    total = jnp.sum(partial)
    return (total / jnp.float32(n)).astype(jnp.float32)


def _reference(pred_mean, pred_stddev, target):
    # Pure-JAX reference mirroring the PyTorch forward.
    eps = _EPS
    normed_diff = (target - pred_mean + eps) / (pred_stddev + eps)
    quot = (pred_mean + eps) / (pred_stddev + eps)
    ndtr = jax.scipy.stats.norm.cdf
    cdf = ndtr(quot)
    cdf_n = ndtr(normed_diff)
    cdf_s = ndtr(math.sqrt(2.0) * quot)
    pdf_n = jnp.exp(-0.5 * normed_diff**2) / math.sqrt(2.0 * math.pi)
    crps = pred_stddev * cdf ** (-2) * (
        normed_diff * cdf * (2 * cdf_n + cdf - 2)
        + 2 * pdf_n * cdf
        - (1.0 / math.sqrt(math.pi)) * cdf_s
    )
    return jnp.mean(crps)


if __name__ == "__main__":
    key = jax.random.PRNGKey(0)
    k1, k2, k3 = jax.random.split(key, 3)

    shape = (2, 4, 16, 16)  # NCHW
    pred_mean = jax.random.normal(k1, shape, dtype=jnp.float32)
    pred_stddev = jnp.abs(jax.random.normal(k2, shape, dtype=jnp.float32)) + 0.5
    target = jax.random.normal(k3, shape, dtype=jnp.float32)

    loss = jax.jit(crps_gaussian_truncated_loss)(pred_mean, pred_stddev, target)
    loss = jax.block_until_ready(loss)

    ref = _reference(pred_mean, pred_stddev, target)
    assert jnp.isfinite(loss)
    assert jnp.allclose(loss, ref, rtol=2e-3, atol=2e-3), (loss, ref)

    print("KERNEL_OK")
</pallas_src>

<mosaic_0001>
module attributes {stable_mosaic.version = 11 : i64} {
  func.func @kernel(%arg0: i32, %arg1: memref<16x128xf32, #tpu.memory_space<vmem>>, %arg2: memref<16x128xf32, #tpu.memory_space<vmem>>, %arg3: memref<16x128xf32, #tpu.memory_space<vmem>>, %arg4: memref<8x128xf32, #tpu.memory_space<vmem>>) attributes {dimension_semantics = [#tpu.dimension_semantics<arbitrary>], iteration_bounds = array<i64: 1>, scalar_prefetch = 0 : i64, scratch_operands = 0 : i64, tpu.core_type = #tpu.core_type<tc>, window_params = [{transform_indices = @transform_0, window_bounds = array<i64: 16, 128>}, {transform_indices = @transform_1, window_bounds = array<i64: 16, 128>}, {transform_indices = @transform_2, window_bounds = array<i64: 16, 128>}, {pipeline_mode = #tpu.pipeline_mode<synchronous>, transform_indices = @transform_3, window_bounds = array<i64: 8, 128>}]} {
    %c0_i32 = arith.constant 0 : i32
    %0 = arith.cmpi eq, %arg0, %c0_i32 : i32
    %1 = arith.extui %0 : i1 to i32
    %c0_i32_0 = arith.constant 0 : i32
    %2 = arith.cmpi ne, %1, %c0_i32_0 : i32
    scf.if %2 {
      %cst_55 = arith.constant 0.000000e+00 : f32
      %153 = vector.broadcast %cst_55 : f32 to vector<8x128xf32>
      %c0_56 = arith.constant 0 : index
      %c0_57 = arith.constant 0 : index
      %154 = vector.load %arg4[%c0_56, %c0_57] : memref<8x128xf32, #tpu.memory_space<vmem>>, vector<8x128xf32>
      tpu.vector_store %arg4[%c0_56, %c0_57], %153 {strides = array<i32>} : memref<8x128xf32, #tpu.memory_space<vmem>>, vector<8x128xf32>,
    } else {
    }
    %c0 = arith.constant 0 : index
    %c0_1 = arith.constant 0 : index
    %3 = vector.load %arg1[%c0, %c0_1] : memref<16x128xf32, #tpu.memory_space<vmem>>, vector<16x128xf32>
    %c0_2 = arith.constant 0 : index
    %c0_3 = arith.constant 0 : index
    %4 = vector.load %arg2[%c0_2, %c0_3] : memref<16x128xf32, #tpu.memory_space<vmem>>, vector<16x128xf32>
    %c0_4 = arith.constant 0 : index
    %c0_5 = arith.constant 0 : index
    %5 = vector.load %arg3[%c0_4, %c0_5] : memref<16x128xf32, #tpu.memory_space<vmem>>, vector<16x128xf32>
    %cst = arith.constant 1.000000e-15 : f32
    %6 = vector.broadcast %cst : f32 to vector<16x128xf32>
    %7 = arith.addf %4, %6 : vector<16x128xf32>
    %cst_6 = arith.constant 1.000000e+00 : f32
    %8 = vector.broadcast %cst_6 : f32 to vector<16x128xf32>
    %9 = arith.divf %8, %7 : vector<16x128xf32>
    %10 = arith.subf %5, %3 : vector<16x128xf32>
    %cst_7 = arith.constant 1.000000e-15 : f32
    %11 = vector.broadcast %cst_7 : f32 to vector<16x128xf32>
    %12 = arith.addf %10, %11 : vector<16x128xf32>
    %13 = arith.mulf %12, %9 : vector<16x128xf32>
    %cst_8 = arith.constant 1.000000e-15 : f32
    %14 = vector.broadcast %cst_8 : f32 to vector<16x128xf32>
    %15 = arith.addf %3, %14 : vector<16x128xf32>
    %16 = arith.mulf %15, %9 : vector<16x128xf32>
    %cst_9 = arith.constant -5.000000e-01 : f32
    %17 = vector.broadcast %cst_9 : f32 to vector<16x128xf32>
    %18 = arith.mulf %17, %16 : vector<16x128xf32>
    %19 = arith.mulf %18, %16 : vector<16x128xf32>
    %20 = math.exp %19 : vector<16x128xf32>
    %cst_10 = arith.constant -5.000000e-01 : f32
    %21 = vector.broadcast %cst_10 : f32 to vector<16x128xf32>
    %22 = arith.mulf %21, %13 : vector<16x128xf32>
    %23 = arith.mulf %22, %13 : vector<16x128xf32>
    %24 = math.exp %23 : vector<16x128xf32>
    %25 = math.absf %16 : vector<16x128xf32>
    %26 = math.absf %13 : vector<16x128xf32>
    %cst_11 = arith.constant 0.707106769 : f32
    %27 = vector.broadcast %cst_11 : f32 to vector<16x128xf32>
    %28 = arith.mulf %25, %27 : vector<16x128xf32>
    %cst_12 = arith.constant 0.327591091 : f32
    %29 = vector.broadcast %cst_12 : f32 to vector<16x128xf32>
    %30 = arith.mulf %29, %28 : vector<16x128xf32>
    %cst_13 = arith.constant 1.000000e+00 : f32
    %31 = vector.broadcast %cst_13 : f32 to vector<16x128xf32>
    %32 = arith.addf %31, %30 : vector<16x128xf32>
    %33 = tpu.reciprocal %32 {approx = true} : vector<16x128xf32> -> vector<16x128xf32>
    %34 = arith.mulf %32, %33 : vector<16x128xf32>
    %cst_14 = arith.constant 2.000000e+00 : f32
    %35 = vector.broadcast %cst_14 : f32 to vector<16x128xf32>
    %36 = arith.subf %35, %34 : vector<16x128xf32>
    %37 = arith.mulf %33, %36 : vector<16x128xf32>
    %cst_15 = arith.constant 1.06140542 : f32
    %38 = vector.broadcast %cst_15 : f32 to vector<16x128xf32>
    %39 = arith.mulf %38, %37 : vector<16x128xf32>
    %cst_16 = arith.constant -1.45315206 : f32
    %40 = vector.broadcast %cst_16 : f32 to vector<16x128xf32>
    %41 = arith.addf %39, %40 : vector<16x128xf32>
    %42 = arith.mulf %41, %37 : vector<16x128xf32>
    %cst_17 = arith.constant 1.42141378 : f32
    %43 = vector.broadcast %cst_17 : f32 to vector<16x128xf32>
    %44 = arith.addf %42, %43 : vector<16x128xf32>
    %45 = arith.mulf %44, %37 : vector<16x128xf32>
    %cst_18 = arith.constant -0.284496725 : f32
    %46 = vector.broadcast %cst_18 : f32 to vector<16x128xf32>
    %47 = arith.addf %45, %46 : vector<16x128xf32>
    %48 = arith.mulf %47, %37 : vector<16x128xf32>
    %cst_19 = arith.constant 0.254829586 : f32
    %49 = vector.broadcast %cst_19 : f32 to vector<16x128xf32>
    %50 = arith.addf %48, %49 : vector<16x128xf32>
    %51 = arith.mulf %50, %37 : vector<16x128xf32>
    %52 = arith.mulf %51, %20 : vector<16x128xf32>
    %cst_20 = arith.constant 5.000000e-01 : f32
    %53 = vector.broadcast %cst_20 : f32 to vector<16x128xf32>
    %54 = arith.mulf %53, %52 : vector<16x128xf32>
    %cst_21 = arith.constant 0.707106769 : f32
    %55 = vector.broadcast %cst_21 : f32 to vector<16x128xf32>
    %56 = arith.mulf %26, %55 : vector<16x128xf32>
    %cst_22 = arith.constant 0.327591091 : f32
    %57 = vector.broadcast %cst_22 : f32 to vector<16x128xf32>
    %58 = arith.mulf %57, %56 : vector<16x128xf32>
    %cst_23 = arith.constant 1.000000e+00 : f32
    %59 = vector.broadcast %cst_23 : f32 to vector<16x128xf32>
    %60 = arith.addf %59, %58 : vector<16x128xf32>
    %61 = tpu.reciprocal %60 {approx = true} : vector<16x128xf32> -> vector<16x128xf32>
    %62 = arith.mulf %60, %61 : vector<16x128xf32>
    %cst_24 = arith.constant 2.000000e+00 : f32
    %63 = vector.broadcast %cst_24 : f32 to vector<16x128xf32>
    %64 = arith.subf %63, %62 : vector<16x128xf32>
    %65 = arith.mulf %61, %64 : vector<16x128xf32>
    %cst_25 = arith.constant 1.06140542 : f32
    %66 = vector.broadcast %cst_25 : f32 to vector<16x128xf32>
    %67 = arith.mulf %66, %65 : vector<16x128xf32>
    %cst_26 = arith.constant -1.45315206 : f32
    %68 = vector.broadcast %cst_26 : f32 to vector<16x128xf32>
    %69 = arith.addf %67, %68 : vector<16x128xf32>
    %70 = arith.mulf %69, %65 : vector<16x128xf32>
    %cst_27 = arith.constant 1.42141378 : f32
    %71 = vector.broadcast %cst_27 : f32 to vector<16x128xf32>
    %72 = arith.addf %70, %71 : vector<16x128xf32>
    %73 = arith.mulf %72, %65 : vector<16x128xf32>
    %cst_28 = arith.constant -0.284496725 : f32
    %74 = vector.broadcast %cst_28 : f32 to vector<16x128xf32>
    %75 = arith.addf %73, %74 : vector<16x128xf32>
    %76 = arith.mulf %75, %65 : vector<16x128xf32>
    %cst_29 = arith.constant 0.254829586 : f32
    %77 = vector.broadcast %cst_29 : f32 to vector<16x128xf32>
    %78 = arith.addf %76, %77 : vector<16x128xf32>
    %79 = arith.mulf %78, %65 : vector<16x128xf32>
    %80 = arith.mulf %79, %24 : vector<16x128xf32>
    %cst_30 = arith.constant 5.000000e-01 : f32
    %81 = vector.broadcast %cst_30 : f32 to vector<16x128xf32>
    %82 = arith.mulf %81, %80 : vector<16x128xf32>
    %83 = arith.mulf %20, %20 : vector<16x128xf32>
    %cst_31 = arith.constant 0.327591091 : f32
    %84 = vector.broadcast %cst_31 : f32 to vector<16x128xf32>
    %85 = arith.mulf %84, %25 : vector<16x128xf32>
    %cst_32 = arith.constant 1.000000e+00 : f32
    %86 = vector.broadcast %cst_32 : f32 to vector<16x128xf32>
    %87 = arith.addf %86, %85 : vector<16x128xf32>
    %88 = tpu.reciprocal %87 {approx = true} : vector<16x128xf32> -> vector<16x128xf32>
    %89 = arith.mulf %87, %88 : vector<16x128xf32>
    %cst_33 = arith.constant 2.000000e+00 : f32
    %90 = vector.broadcast %cst_33 : f32 to vector<16x128xf32>
    %91 = arith.subf %90, %89 : vector<16x128xf32>
    %92 = arith.mulf %88, %91 : vector<16x128xf32>
    %cst_34 = arith.constant 1.06140542 : f32
    %93 = vector.broadcast %cst_34 : f32 to vector<16x128xf32>
    %94 = arith.mulf %93, %92 : vector<16x128xf32>
    %cst_35 = arith.constant -1.45315206 : f32
    %95 = vector.broadcast %cst_35 : f32 to vector<16x128xf32>
    %96 = arith.addf %94, %95 : vector<16x128xf32>
    %97 = arith.mulf %96, %92 : vector<16x128xf32>
    %cst_36 = arith.constant 1.42141378 : f32
    %98 = vector.broadcast %cst_36 : f32 to vector<16x128xf32>
    %99 = arith.addf %97, %98 : vector<16x128xf32>
    %100 = arith.mulf %99, %92 : vector<16x128xf32>
    %cst_37 = arith.constant -0.284496725 : f32
    %101 = vector.broadcast %cst_37 : f32 to vector<16x128xf32>
    %102 = arith.addf %100, %101 : vector<16x128xf32>
    %103 = arith.mulf %102, %92 : vector<16x128xf32>
    %cst_38 = arith.constant 0.254829586 : f32
    %104 = vector.broadcast %cst_38 : f32 to vector<16x128xf32>
    %105 = arith.addf %103, %104 : vector<16x128xf32>
    %106 = arith.mulf %105, %92 : vector<16x128xf32>
    %107 = arith.mulf %106, %83 : vector<16x128xf32>
    %cst_39 = arith.constant 5.000000e-01 : f32
    %108 = vector.broadcast %cst_39 : f32 to vector<16x128xf32>
    %109 = arith.mulf %108, %107 : vector<16x128xf32>
    %cst_40 = arith.constant 0.000000e+00 : f32
    %110 = vector.broadcast %cst_40 : f32 to vector<16x128xf32>
    %111 = arith.cmpf olt, %16, %110 : vector<16x128xf32>
    %cst_41 = arith.constant 1.000000e+00 : f32
    %112 = vector.broadcast %cst_41 : f32 to vector<16x128xf32>
    %113 = arith.subf %112, %54 : vector<16x128xf32>
    %114 = arith.select %111, %54, %113 : vector<16x128xi1>, vector<16x128xf32>
    %cst_42 = arith.constant 1.000000e+00 : f32
    %115 = vector.broadcast %cst_42 : f32 to vector<16x128xf32>
    %116 = arith.subf %115, %109 : vector<16x128xf32>
    %117 = arith.select %111, %109, %116 : vector<16x128xi1>, vector<16x128xf32>
    %cst_43 = arith.constant 0.000000e+00 : f32
    %118 = vector.broadcast %cst_43 : f32 to vector<16x128xf32>
    %119 = arith.cmpf olt, %13, %118 : vector<16x128xf32>
    %cst_44 = arith.constant 1.000000e+00 : f32
    %120 = vector.broadcast %cst_44 : f32 to vector<16x128xf32>
    %121 = arith.subf %120, %82 : vector<16x128xf32>
    %122 = arith.select %119, %82, %121 : vector<16x128xi1>, vector<16x128xf32>
    %cst_45 = arith.constant 0.398942292 : f32
    %123 = vector.broadcast %cst_45 : f32 to vector<16x128xf32>
    %124 = arith.mulf %24, %123 : vector<16x128xf32>
    %125 = tpu.reciprocal %114 {approx = true} : vector<16x128xf32> -> vector<16x128xf32>
    %126 = arith.mulf %114, %125 : vector<16x128xf32>
    %cst_46 = arith.constant 2.000000e+00 : f32
    %127 = vector.broadcast %cst_46 : f32 to vector<16x128xf32>
    %128 = arith.subf %127, %126 : vector<16x128xf32>
    %129 = arith.mulf %125, %128 : vector<16x128xf32>
    %130 = arith.mulf %129, %129 : vector<16x128xf32>
    %131 = arith.mulf %4, %130 : vector<16x128xf32>
    %132 = arith.mulf %13, %114 : vector<16x128xf32>
    %cst_47 = arith.constant 2.000000e+00 : f32
    %133 = vector.broadcast %cst_47 : f32 to vector<16x128xf32>
    %134 = arith.mulf %133, %122 : vector<16x128xf32>
    %135 = arith.addf %134, %114 : vector<16x128xf32>
    %cst_48 = arith.constant 2.000000e+00 : f32
    %136 = vector.broadcast %cst_48 : f32 to vector<16x128xf32>
    %137 = arith.subf %135, %136 : vector<16x128xf32>
    %138 = arith.mulf %132, %137 : vector<16x128xf32>
    %cst_49 = arith.constant 2.000000e+00 : f32
    %139 = vector.broadcast %cst_49 : f32 to vector<16x128xf32>
    %140 = arith.mulf %139, %124 : vector<16x128xf32>
    %141 = arith.mulf %140, %114 : vector<16x128xf32>
    %142 = arith.addf %138, %141 : vector<16x128xf32>
    %cst_50 = arith.constant 0.564189613 : f32
    %143 = vector.broadcast %cst_50 : f32 to vector<16x128xf32>
    %144 = arith.mulf %143, %117 : vector<16x128xf32>
    %145 = arith.subf %142, %144 : vector<16x128xf32>
    %146 = arith.mulf %131, %145 : vector<16x128xf32>
    %147 = vector.extract_strided_slice %146 {offsets = [0, 0], sizes = [8, 128], strides = [1, 1]} : vector<16x128xf32> to vector<8x128xf32>
    %148 = vector.extract_strided_slice %146 {offsets = [8, 0], sizes = [8, 128], strides = [1, 1]} : vector<16x128xf32> to vector<8x128xf32>
    %149 = arith.addf %147, %148 : vector<8x128xf32>
    %c0_51 = arith.constant 0 : index
    %c0_52 = arith.constant 0 : index
    %150 = vector.load %arg4[%c0_51, %c0_52] : memref<8x128xf32, #tpu.memory_space<vmem>>, vector<8x128xf32>
    %151 = arith.addf %150, %149 : vector<8x128xf32>
    %c0_53 = arith.constant 0 : index
    %c0_54 = arith.constant 0 : index
    %152 = vector.load %arg4[%c0_53, %c0_54] : memref<8x128xf32, #tpu.memory_space<vmem>>, vector<8x128xf32>
    tpu.vector_store %arg4[%c0_53, %c0_54], %151 {strides = array<i32>} : memref<8x128xf32, #tpu.memory_space<vmem>>, vector<8x128xf32>,
    return
  }
  func.func @transform_0(%arg0: i32) -> (i32, i32) {
    %c0_i32 = arith.constant 0 : i32
    %c0_i32_0 = arith.constant 0 : i32
    return %arg0, %c0_i32 : i32, i32
  }
  func.func @transform_1(%arg0: i32) -> (i32, i32) {
    %c0_i32 = arith.constant 0 : i32
    %c0_i32_0 = arith.constant 0 : i32
    return %arg0, %c0_i32 : i32, i32
  }
  func.func @transform_2(%arg0: i32) -> (i32, i32) {
    %c0_i32 = arith.constant 0 : i32
    %c0_i32_0 = arith.constant 0 : i32
    return %arg0, %c0_i32 : i32, i32
  }
  func.func @transform_3(%arg0: i32) -> (i32, i32) {
    %c0_i32 = arith.constant 0 : i32
    %c0_i32_0 = arith.constant 0 : i32
    %c0_i32_1 = arith.constant 0 : i32
    return %c0_i32, %c0_i32_0 : i32, i32
  }
}

</mosaic_0001>

<llo_original>
// kernel: crps_gaussian_truncated_loss.1
$region0: #{crps_gaussian_truncated_loss.1}
  #allocation0 [shape = 'u32[]', space=smem, size = 0x4, offset = 0x4, fixed_abs, tag = 'smem constant byte address 0x4 - core index']
  #allocation1 [shape = 'u32[144,128]{1,0:T(1,128)}', space=vmem, size = 0x12000, scoped, tag = 'internal scratch']
  %s0 = inlined_call_operand.vmem [shape: f32[16,128], index: 0, kind: input, shape index: {}]
  %s1 = inlined_call_operand.vmem [shape: f32[16,128], index: 1, kind: input, shape index: {}]
  %s2 = inlined_call_operand.vmem [shape: f32[16,128], index: 2, kind: input, shape index: {}]
  %s3 = inlined_call_operand.vmem [shape: f32[8,128], index: 3, kind: output, shape index: {}]
  %s4 = sld [smem:[#allocation0]]
  $region26: #{crps_gaussian_truncated_loss.1} parent=0
    _
  %s6 = ssub.s32 1, %s4
  %s7 = scalar_select 0, %s6, %s4
  // Predicated region
  $region2: #{crps_gaussian_truncated_loss.1} parent=0 // pred_check
    _
  $region3: #{crps_gaussian_truncated_loss.1} parent=0 // pred_check_branch
    %9 = sbr.rel (0) target = $region5
  $region4: #{crps_gaussian_truncated_loss.1} parent=0 // pred_region
    _
  $region5: #{crps_gaussian_truncated_loss.1} parent=0 // pred_fallthru
    _
  // Predicated region
  $region6: #{crps_gaussian_truncated_loss.1} parent=0 // pred_check
    _
  $region7: #{crps_gaussian_truncated_loss.1} parent=0 // pred_check_branch
    %11 = sbr.rel (0) target = $region9
  $region8: #{crps_gaussian_truncated_loss.1} parent=0 // pred_region
    _
  $region9: #{crps_gaussian_truncated_loss.1} parent=0 // pred_fallthru
    _
  // Predicated region
  $region10: #{crps_gaussian_truncated_loss.1} parent=0 // pred_check
    _
  $region11: #{crps_gaussian_truncated_loss.1} parent=0 // pred_check_branch
    %13 = sbr.rel (0) target = $region13
  $region12: #{crps_gaussian_truncated_loss.1} parent=0 // pred_region
    _
  $region13: #{crps_gaussian_truncated_loss.1} parent=0 // pred_fallthru
    _
  %p14 = scmp.eq.s32.totalorder 0, 0
  // Predicated region
  $region14: #{crps_gaussian_truncated_loss.1} parent=0 // pred_check
    %p15 = pneg %p14
  $region15: #{crps_gaussian_truncated_loss.1} parent=0 // pred_check_branch
    %17 = sbr.rel (%p15) target = $region17
  $region16: #{crps_gaussian_truncated_loss.1} parent=0 // pred_region
    %18 = vst [vmem:[%s3] sm:$0xff] 0.0
  $region17: #{crps_gaussian_truncated_loss.1} parent=0 // pred_fallthru
    _
  %v19 = vld [vmem:[%s0] sm:$0xff]
  %v20 = vld [vmem:[%s0 + $0x8] sm:$0xff]
  %v21 = vld [vmem:[%s1] sm:$0xff]
  %v22 = vld [vmem:[%s1 + $0x8] sm:$0xff]
  %v23 = vld [vmem:[%s2] sm:$0xff]
  %v24 = vld [vmem:[%s2 + $0x8] sm:$0xff]
  %v25 = vadd.f32 %v21, 1e-15
  %v26 = vadd.f32 %v22, 1e-15
  %v27 = vrcp.pop %v25
  %v28 = vmul.f32 1.0, %v27
  %v29 = vrcp.pop %v26
  %v30 = vmul.f32 1.0, %v29
  %v31 = vsub.f32 %v23, %v19
  %v32 = vsub.f32 %v24, %v20
  %v33 = vadd.f32 %v31, 1e-15
  %v34 = vadd.f32 %v32, 1e-15
  %v35 = vmul.f32 %v33, %v28
  %v36 = vmul.f32 %v34, %v30
  %v37 = vadd.f32 %v19, 1e-15
  %v38 = vadd.f32 %v20, 1e-15
  %v39 = vmul.f32 %v37, %v28
  %v40 = vmul.f32 %v38, %v30
  %v41 = vmul.f32 %v39, -0.5
  %v42 = vmul.f32 %v40, -0.5
  %v43 = vmul.f32 %v41, %v39
  %v44 = vmul.f32 %v42, %v40
  %v45 = vmul.f32 %v43, 1.442695
  %v46 = vpow.pop %v45
  %v47 = vmul.f32 %v44, 1.442695
  %v48 = vpow.pop %v47
  %v49 = vmul.f32 %v35, -0.5
  %v50 = vmul.f32 %v36, -0.5
  %v51 = vmul.f32 %v49, %v35
  %v52 = vmul.f32 %v50, %v36
  %v53 = vmul.f32 %v51, 1.442695
  %v54 = vpow.pop %v53
  %v55 = vmul.f32 %v52, 1.442695
  %v56 = vpow.pop %v55
  %v57 = vand.u32 2147483647, %v39
  %v58 = vand.u32 2147483647, %v40
  %v59 = vand.u32 2147483647, %v35
  %v60 = vand.u32 2147483647, %v36
  %v61 = vmul.f32 %v57, 0.70710677
  %v62 = vmul.f32 %v58, 0.70710677
  %v63 = vmul.f32 %v61, 0.3275911
  %v64 = vmul.f32 %v62, 0.3275911
  %v65 = vadd.f32 %v63, 1.0
  %v66 = vadd.f32 %v64, 1.0
  %v67 = vrcp.pop %v65
  %v68 = vrcp.pop %v66
  %v69 = vmul.f32 %v65, %v67
  %v70 = vmul.f32 %v66, %v68
  %v71 = vsub.f32 2.0, %v69
  %v72 = vsub.f32 2.0, %v70
  %v73 = vmul.f32 %v67, %v71
  %v74 = vmul.f32 %v68, %v72
  %v75 = vmul.f32 %v73, 1.0614054
  %v76 = vmul.f32 %v74, 1.0614054
  %v77 = vadd.f32 %v75, -1.4531521
  %v78 = vadd.f32 %v76, -1.4531521
  %v79 = vmul.f32 %v77, %v73
  %v80 = vmul.f32 %v78, %v74
  %v81 = vadd.f32 %v79, 1.4214138
  %v82 = vadd.f32 %v80, 1.4214138
  %v83 = vmul.f32 %v81, %v73
  %v84 = vmul.f32 %v82, %v74
  %v85 = vadd.f32 %v83, -0.28449672
  %v86 = vadd.f32 %v84, -0.28449672
  %v87 = vmul.f32 %v85, %v73
  %v88 = vmul.f32 %v86, %v74
  %v89 = vadd.f32 %v87, 0.2548296
  %v90 = vadd.f32 %v88, 0.2548296
  %v91 = vmul.f32 %v89, %v73
  %v92 = vmul.f32 %v90, %v74
  %v93 = vmul.f32 %v91, %v46
  %v94 = vmul.f32 %v92, %v48
  %v95 = vmul.f32 %v93, 0.5
  %v96 = vmul.f32 %v94, 0.5
  %v97 = vmul.f32 %v59, 0.70710677
  %v98 = vmul.f32 %v60, 0.70710677
  %v99 = vmul.f32 %v97, 0.3275911
  %v100 = vmul.f32 %v98, 0.3275911
  %v101 = vadd.f32 %v99, 1.0
  %v102 = vadd.f32 %v100, 1.0
  %v103 = vrcp.pop %v101
  %v104 = vrcp.pop %v102
  %v105 = vmul.f32 %v101, %v103
  %v106 = vmul.f32 %v102, %v104
  %v107 = vsub.f32 2.0, %v105
  %v108 = vsub.f32 2.0, %v106
  %v109 = vmul.f32 %v103, %v107
  %v110 = vmul.f32 %v104, %v108
  %v111 = vmul.f32 %v109, 1.0614054
  %v112 = vmul.f32 %v110, 1.0614054
  %v113 = vadd.f32 %v111, -1.4531521
  %v114 = vadd.f32 %v112, -1.4531521
  %v115 = vmul.f32 %v113, %v109
  %v116 = vmul.f32 %v114, %v110
  %v117 = vadd.f32 %v115, 1.4214138
  %v118 = vadd.f32 %v116, 1.4214138
  %v119 = vmul.f32 %v117, %v109
  %v120 = vmul.f32 %v118, %v110
  %v121 = vadd.f32 %v119, -0.28449672
  %v122 = vadd.f32 %v120, -0.28449672
  %v123 = vmul.f32 %v121, %v109
  %v124 = vmul.f32 %v122, %v110
  %v125 = vadd.f32 %v123, 0.2548296
  %v126 = vadd.f32 %v124, 0.2548296
  %v127 = vmul.f32 %v125, %v109
  %v128 = vmul.f32 %v126, %v110
  %v129 = vmul.f32 %v127, %v54
  %v130 = vmul.f32 %v128, %v56
  %v131 = vmul.f32 %v129, 0.5
  %v132 = vmul.f32 %v130, 0.5
  %v133 = vmul.f32 %v46, %v46
  %v134 = vmul.f32 %v48, %v48
  %v135 = vmul.f32 %v57, 0.3275911
  %v136 = vmul.f32 %v58, 0.3275911
  %v137 = vadd.f32 %v135, 1.0
  %v138 = vadd.f32 %v136, 1.0
  %v139 = vrcp.pop %v137
  %v140 = vrcp.pop %v138
  %v141 = vmul.f32 %v137, %v139
  %v142 = vmul.f32 %v138, %v140
  %v143 = vsub.f32 2.0, %v141
  %v144 = vsub.f32 2.0, %v142
  %v145 = vmul.f32 %v139, %v143
  %v146 = vmul.f32 %v140, %v144
  %v147 = vmul.f32 %v145, 1.0614054
  %v148 = vmul.f32 %v146, 1.0614054
  %v149 = vadd.f32 %v147, -1.4531521
  %v150 = vadd.f32 %v148, -1.4531521
  %v151 = vmul.f32 %v149, %v145
  %v152 = vmul.f32 %v150, %v146
  %v153 = vadd.f32 %v151, 1.4214138
  %v154 = vadd.f32 %v152, 1.4214138
  %v155 = vmul.f32 %v153, %v145
  %v156 = vmul.f32 %v154, %v146
  %v157 = vadd.f32 %v155, -0.28449672
  %v158 = vadd.f32 %v156, -0.28449672
  %v159 = vmul.f32 %v157, %v145
  %v160 = vmul.f32 %v158, %v146
  %v161 = vadd.f32 %v159, 0.2548296
  %v162 = vadd.f32 %v160, 0.2548296
  %v163 = vmul.f32 %v161, %v145
  %v164 = vmul.f32 %v162, %v146
  %v165 = vmul.f32 %v163, %v133
  %v166 = vmul.f32 %v164, %v134
  %v167 = vmul.f32 %v165, 0.5
  %v168 = vmul.f32 %v166, 0.5
  %vm169 = vcmp.lt.f32.partialorder %v39, 0.0
  %vm170 = vcmp.lt.f32.partialorder %v40, 0.0
  %v171 = vsub.f32 1.0, %v95
  %v172 = vsub.f32 1.0, %v96
  %v173 = vsel %vm169, %v95, %v171
  %v174 = vsel %vm170, %v96, %v172
  %v175 = vsub.f32 1.0, %v167
  %v176 = vsub.f32 1.0, %v168
  %v177 = vsel %vm169, %v167, %v175
  %v178 = vsel %vm170, %v168, %v176
  %vm179 = vcmp.lt.f32.partialorder %v35, 0.0
  %vm180 = vcmp.lt.f32.partialorder %v36, 0.0
  %v181 = vsub.f32 1.0, %v131
  %v182 = vsub.f32 1.0, %v132
  %v183 = vsel %vm179, %v131, %v181
  %v184 = vsel %vm180, %v132, %v182
  %v185 = vmul.f32 %v54, 0.3989423
  %v186 = vmul.f32 %v56, 0.3989423
  %v187 = vrcp.pop %v173
  %v188 = vrcp.pop %v174
  %v189 = vmul.f32 %v173, %v187
  %v190 = vmul.f32 %v174, %v188
  %v191 = vsub.f32 2.0, %v189
  %v192 = vsub.f32 2.0, %v190
  %v193 = vmul.f32 %v187, %v191
  %v194 = vmul.f32 %v188, %v192
  %v195 = vmul.f32 %v193, %v193
  %v196 = vmul.f32 %v194, %v194
  %v197 = vmul.f32 %v21, %v195
  %v198 = vmul.f32 %v22, %v196
  %v199 = vmul.f32 %v35, %v173
  %v200 = vmul.f32 %v36, %v174
  %v201 = vmul.f32 %v183, 2.0
  %v202 = vmul.f32 %v184, 2.0
  %v203 = vadd.f32 %v201, %v173
  %v204 = vadd.f32 %v202, %v174
  %v205 = vsub.f32 %v203, 2.0
  %v206 = vsub.f32 %v204, 2.0
  %v207 = vmul.f32 %v199, %v205
  %v208 = vmul.f32 %v200, %v206
  %v209 = vmul.f32 %v185, 2.0
  %v210 = vmul.f32 %v186, 2.0
  %v211 = vmul.f32 %v209, %v173
  %v212 = vmul.f32 %v210, %v174
  %v213 = vadd.f32 %v207, %v211
  %v214 = vadd.f32 %v208, %v212
  %v215 = vmul.f32 %v177, 0.5641896
  %v216 = vmul.f32 %v178, 0.5641896
  %v217 = vsub.f32 %v213, %v215
  %v218 = vsub.f32 %v214, %v216
  %v219 = vmul.f32 %v197, %v217
  %v220 = vmul.f32 %v198, %v218
  %v221 = vadd.f32 %v219, %v220
  %v222 = vld [vmem:[%s3] sm:$0xff]
  %v223 = vadd.f32 %v222, %v221
  %224 = vst [vmem:[%s3] sm:$0xff] %v223
  // Predicated region
  $region18: #{crps_gaussian_truncated_loss.1} parent=0 // pred_check
    _
  $region19: #{crps_gaussian_truncated_loss.1} parent=0 // pred_check_branch
    %226 = sbr.rel (0) target = $region21
  $region20: #{crps_gaussian_truncated_loss.1} parent=0 // pred_region
    _
  $region21: #{crps_gaussian_truncated_loss.1} parent=0 // pred_fallthru
    _
  // Predicated region
  $region22: #{crps_gaussian_truncated_loss.1} parent=0 // pred_check
    _
  $region23: #{crps_gaussian_truncated_loss.1} parent=0 // pred_check_branch
    %228 = sbr.rel (0) target = $region25
  $region24: #{crps_gaussian_truncated_loss.1} parent=0 // pred_region
    _
  $region25: #{crps_gaussian_truncated_loss.1} parent=0 // pred_fallthru
    _

</llo_original>
